<compile_context>
chip_gen: v6e
topology: v6e:2x2x1
jax: 0.10.0
libtpu: 0.0.40
codegen_flags: <defaults>
</compile_context>

<pallas_src>
import jax
import jax.numpy as jnp
from jax.experimental import pallas as pl
from jax.experimental.pallas import tpu as pltpu

_LANE = 128


def transe_kernel(h_ref, r_ref, t_ref, o_ref):
    # h/r/t blocks are (D, tb): batch on lanes, embedding dim on sublanes.
    # Elementwise translate, square, sublane reduce (XLU), sqrt (EUP), then a
    # lane-dense (1, tb) store.  Accumulation is forced to f32 so bf16 tables
    # are also supported without accuracy loss.
    h = h_ref[...].astype(jnp.float32)
    r = r_ref[...].astype(jnp.float32)
    t = t_ref[...].astype(jnp.float32)
    d = h + r - t
    s = jnp.sum(d * d, axis=0, keepdims=True)           # (1, tb)
    o_ref[...] = jnp.sqrt(s).astype(o_ref.dtype)


def _choose_batch_tile(B, D, tb):
    """Pick the batch tile (lane axis): multiple of 128, VMEM-safe, >=2 grid
    steps for megacore when the batch is large enough."""
    tb = max(_LANE, (int(tb) // _LANE) * _LANE)
    # VMEM budget: 3 inputs x 2 pipeline buffers x D x tb x 4 B <= ~24 MiB.
    vmem_cap = (24 * 1024 * 1024) // (3 * 2 * 4 * max(int(D), 1))
    tb = min(tb, max(_LANE, (vmem_cap // _LANE) * _LANE), 8192)
    b_pad = pl.cdiv(B, _LANE) * _LANE
    tb = min(tb, b_pad)                       # tiny batches: one small tile
    if b_pad >= 2 * _LANE and pl.cdiv(B, tb) < 2:
        # Keep >= 2 grid steps so ("parallel",) can use both v7x TensorCores.
        tb = pl.cdiv(pl.cdiv(B, 2), _LANE) * _LANE
    return tb


def transe_score_t(h_t, r_t, t_t, *, tb=4096):
    """h_t, r_t, t_t: (dim, B) arrays (batch on the lane axis).

    Returns (B,) float32 L2 scores of h + r - t."""
    D, B = h_t.shape
    tb = _choose_batch_tile(B, D, tb)
    grid = (pl.cdiv(B, tb),)                  # ragged last tile, no padding

    out = pl.pallas_call(
        transe_kernel,
        out_shape=jax.ShapeDtypeStruct((1, B), jnp.float32),
        grid_spec=pltpu.PrefetchScalarGridSpec(
            num_scalar_prefetch=0,
            grid=grid,
            in_specs=[
                pl.BlockSpec((D, tb), lambda i: (0, i)),
                pl.BlockSpec((D, tb), lambda i: (0, i)),
                pl.BlockSpec((D, tb), lambda i: (0, i)),
            ],
            out_specs=pl.BlockSpec((1, tb), lambda i: (0, i)),
        ),
        compiler_params=pltpu.CompilerParams(
            dimension_semantics=("parallel",)),
    )(h_t, r_t, t_t)
    return out[0]


@jax.jit
def transe_forward(ent_emb_t, rel_emb_t, h_ids, r_typ, t_ids):
    # Gathers run in the same jit as the pallas_call and already produce the
    # lane-dense (dim, B) layout (tables are stored transposed), so XLA fuses
    # them into one pass feeding the kernel.
    h = jnp.take(ent_emb_t, h_ids, axis=1)    # (dim, B)
    t = jnp.take(ent_emb_t, t_ids, axis=1)
    r = jnp.take(rel_emb_t, r_typ, axis=1)
    return transe_score_t(h, r, t)


def _init_emb(key, num_embeddings, dim, dtype=jnp.float32):
    # Mirrors Model._init_emb: uniform(-6/sqrt(dim), 6/sqrt(dim)), row L2-norm.
    # Stored transposed (dim, N) so gathered columns feed the kernel directly.
    rng = 6.0 / jnp.sqrt(jnp.float32(dim))
    w = jax.random.uniform(key, (num_embeddings, dim), jnp.float32,
                           minval=-rng, maxval=rng)
    norm = jnp.maximum(jnp.linalg.norm(w, axis=1, keepdims=True), 1e-12)
    return (w / norm).T.astype(dtype)          # (dim, N)


class TransE:
    # p is fixed to 2 in the kernel (module default).
    # TODO(synk): general p-norm (p != 2) not implemented in the kernel.
    def __init__(self, ent_n, rel_n, dim, key, dtype=jnp.float32):
        k1, k2 = jax.random.split(key)
        self.ent_n, self.rel_n, self.dim = ent_n, rel_n, dim
        self.ent_emb_t = _init_emb(k1, ent_n, dim, dtype)   # (dim, ent_n)
        self.rel_emb_t = _init_emb(k2, rel_n, dim, dtype)   # (dim, rel_n)

    def forward(self, h_ids, r_typ, t_ids):
        return transe_forward(self.ent_emb_t, self.rel_emb_t,
                              h_ids, r_typ, t_ids)


def _ref_scores(model, h_ids, r_typ, t_ids):
    h = jnp.take(model.ent_emb_t, h_ids, axis=1).astype(jnp.float32)
    t = jnp.take(model.ent_emb_t, t_ids, axis=1).astype(jnp.float32)
    r = jnp.take(model.rel_emb_t, r_typ, axis=1).astype(jnp.float32)
    return jnp.linalg.norm(h + r - t, ord=2, axis=0)


if __name__ == "__main__":
    ent_n, rel_n, dim = 14541, 237, 32

    key = jax.random.PRNGKey(0)
    k_model, k_h, k_r, k_t, k_h2, k_r2, k_t2 = jax.random.split(key, 7)

    model = TransE(ent_n, rel_n, dim, k_model)

    # Small batch (single 128-lane tile, heavily masked edge store).
    batch = 8
    h_ids = jax.random.randint(k_h, (batch,), 0, ent_n, dtype=jnp.int32)
    t_ids = jax.random.randint(k_t, (batch,), 0, ent_n, dtype=jnp.int32)
    r_typ = jax.random.randint(k_r, (batch,), 0, rel_n, dtype=jnp.int32)

    scores = jax.block_until_ready(model.forward(h_ids, r_typ, t_ids))
    ref = _ref_scores(model, h_ids, r_typ, t_ids)
    assert scores.shape == (batch,)
    assert jnp.allclose(scores, ref, rtol=1e-5, atol=1e-5), (scores, ref)

    # Larger, non-tile-aligned batch (2-step grid + ragged last tile).
    batch2 = 300
    h_ids2 = jax.random.randint(k_h2, (batch2,), 0, ent_n, dtype=jnp.int32)
    t_ids2 = jax.random.randint(k_t2, (batch2,), 0, ent_n, dtype=jnp.int32)
    r_typ2 = jax.random.randint(k_r2, (batch2,), 0, rel_n, dtype=jnp.int32)

    scores2 = jax.block_until_ready(model.forward(h_ids2, r_typ2, t_ids2))
    ref2 = _ref_scores(model, h_ids2, r_typ2, t_ids2)
    assert scores2.shape == (batch2,)
    assert jnp.allclose(scores2, ref2, rtol=1e-5, atol=1e-5), (scores2, ref2)

    print("KERNEL_OK")
</pallas_src>

<mosaic_0001>
module attributes {stable_mosaic.version = 11 : i64} {
  func.func @transe_kernel(%arg0: i32, %arg1: memref<32x128xf32, #tpu.memory_space<vmem>>, %arg2: memref<32x128xf32, #tpu.memory_space<vmem>>, %arg3: memref<32x128xf32, #tpu.memory_space<vmem>>, %arg4: memref<1x128xf32, #tpu.memory_space<vmem>>) attributes {dimension_semantics = [#tpu.dimension_semantics<parallel>], iteration_bounds = array<i64: 1>, scalar_prefetch = 0 : i64, scratch_operands = 0 : i64, tpu.core_type = #tpu.core_type<tc>, window_params = [{transform_indices = @transform_0, window_bounds = array<i64: 32, 128>}, {transform_indices = @transform_1, window_bounds = array<i64: 32, 128>}, {transform_indices = @transform_2, window_bounds = array<i64: 32, 128>}, {transform_indices = @transform_3, window_bounds = array<i64: 1, 128>}]} {
    %c0 = arith.constant 0 : index
    %c0_0 = arith.constant 0 : index
    %0 = vector.load %arg1[%c0, %c0_0] : memref<32x128xf32, #tpu.memory_space<vmem>>, vector<32x128xf32>
    %c0_1 = arith.constant 0 : index
    %c0_2 = arith.constant 0 : index
    %1 = vector.load %arg2[%c0_1, %c0_2] : memref<32x128xf32, #tpu.memory_space<vmem>>, vector<32x128xf32>
    %c0_3 = arith.constant 0 : index
    %c0_4 = arith.constant 0 : index
    %2 = vector.load %arg3[%c0_3, %c0_4] : memref<32x128xf32, #tpu.memory_space<vmem>>, vector<32x128xf32>
    %3 = arith.addf %0, %1 : vector<32x128xf32>
    %4 = arith.subf %3, %2 : vector<32x128xf32>
    %5 = arith.mulf %4, %4 : vector<32x128xf32>
    %cst = arith.constant dense<0.000000e+00> : vector<128xf32>
    %6 = vector.multi_reduction <add>, %5, %cst [0] : vector<32x128xf32> to vector<128xf32>
    %7 = vector.shape_cast %6 : vector<128xf32> to vector<1x128xf32>
    %8 = math.sqrt %7 : vector<1x128xf32>
    %c0_5 = arith.constant 0 : index
    %c0_6 = arith.constant 0 : index
    %9 = vector.load %arg4[%c0_5, %c0_6] : memref<1x128xf32, #tpu.memory_space<vmem>>, vector<1x128xf32>
    tpu.vector_store %arg4[%c0_5, %c0_6], %8 {strides = array<i32>} : memref<1x128xf32, #tpu.memory_space<vmem>>, vector<1x128xf32>,
    return
  }
  func.func @transform_0(%arg0: i32) -> (i32, i32) {
    %c0_i32 = arith.constant 0 : i32
    %c0_i32_0 = arith.constant 0 : i32
    return %c0_i32, %arg0 : i32, i32
  }
  func.func @transform_1(%arg0: i32) -> (i32, i32) {
    %c0_i32 = arith.constant 0 : i32
    %c0_i32_0 = arith.constant 0 : i32
    return %c0_i32, %arg0 : i32, i32
  }
  func.func @transform_2(%arg0: i32) -> (i32, i32) {
    %c0_i32 = arith.constant 0 : i32
    %c0_i32_0 = arith.constant 0 : i32
    return %c0_i32, %arg0 : i32, i32
  }
  func.func @transform_3(%arg0: i32) -> (i32, i32) {
    %c0_i32 = arith.constant 0 : i32
    %c0_i32_0 = arith.constant 0 : i32
    return %c0_i32, %arg0 : i32, i32
  }
}

</mosaic_0001>

<llo_original>
// kernel: transe_forward.1
$region0: #{transe_forward.1}
  #allocation0 [shape = 'u32[]', space=smem, size = 0x4, offset = 0x4, fixed_abs, tag = 'smem constant byte address 0x4 - core index']
  #allocation1 [shape = 'u32[144,128]{1,0:T(1,128)}', space=vmem, size = 0x12000, scoped, tag = 'internal scratch']
  %s0 = inlined_call_operand.vmem [shape: f32[32,8], index: 0, kind: input, shape index: {}]
  %s1 = inlined_call_operand.vmem [shape: f32[32,8], index: 1, kind: input, shape index: {}]
  %s2 = inlined_call_operand.vmem [shape: f32[32,8], index: 2, kind: input, shape index: {}]
  %s3 = inlined_call_operand.hbm [shape: f32[1,8], index: 3, kind: output, shape index: {}]
  %s4 = sld [smem:[#allocation0]]
  $region22: #{transe_forward.1} parent=0
    _
  %s6 = ssub.s32 1, %s4
  %s7 = scalar_select 0, %s6, %s4
  $region1: #{transe_forward.1} parent=0
    #allocation2 [shape = 'u8[512]{0}', space=vmem, size = 0x400, scoped, tag = 'output window, operand 0, single buffered']
    #allocation3 [shape = 's32[1]{0}', space=sflag, size = 0x4, scoped, tag = 'scoped memory for transe_forward.1']
    %8 = vsyncpa [#allocation3], 0
    // Predicated region
    $region2: #{transe_forward.1} parent=1 // pred_check
      _
    $region3: #{transe_forward.1} parent=1 // pred_check_branch
      %10 = sbr.rel (0) target = $region5
    $region4: #{transe_forward.1} parent=1 // pred_region
      _
    $region5: #{transe_forward.1} parent=1 // pred_fallthru
      _
    // Predicated region
    $region6: #{transe_forward.1} parent=1 // pred_check
      _
    $region7: #{transe_forward.1} parent=1 // pred_check_branch
      %12 = sbr.rel (0) target = $region9
    $region8: #{transe_forward.1} parent=1 // pred_region
      _
    $region9: #{transe_forward.1} parent=1 // pred_fallthru
      _
    // Predicated region
    $region10: #{transe_forward.1} parent=1 // pred_check
      _
    $region11: #{transe_forward.1} parent=1 // pred_check_branch
      %14 = sbr.rel (0) target = $region13
    $region12: #{transe_forward.1} parent=1 // pred_region
      _
    $region13: #{transe_forward.1} parent=1 // pred_fallthru
      _
    %v15 = vld [vmem:[%s0] sm:$0xff]
    %v16 = vld [vmem:[%s0 + $0x8] sm:$0xff]
    %v17 = vld [vmem:[%s0 + $0x10] sm:$0xff]
    %v18 = vld [vmem:[%s0 + $0x18] sm:$0xff]
    %v19 = vld [vmem:[%s1] sm:$0xff]
    %v20 = vld [vmem:[%s1 + $0x8] sm:$0xff]
    %v21 = vld [vmem:[%s1 + $0x10] sm:$0xff]
    %v22 = vld [vmem:[%s1 + $0x18] sm:$0xff]
    %v23 = vld [vmem:[%s2] sm:$0xff]
    %v24 = vld [vmem:[%s2 + $0x8] sm:$0xff]
    %v25 = vld [vmem:[%s2 + $0x10] sm:$0xff]
    %v26 = vld [vmem:[%s2 + $0x18] sm:$0xff]
    %v27 = vadd.f32 %v15, %v19
    %v28 = vadd.f32 %v16, %v20
    %v29 = vadd.f32 %v17, %v21
    %v30 = vadd.f32 %v18, %v22
    %v31 = vsub.f32 %v27, %v23
    %v32 = vsub.f32 %v28, %v24
    %v33 = vsub.f32 %v29, %v25
    %v34 = vsub.f32 %v30, %v26
    %v35 = vmul.f32 %v31, %v31
    %v36 = vmul.f32 %v32, %v32
    %v37 = vmul.f32 %v33, %v33
    %v38 = vmul.f32 %v34, %v34
    %v39 = vadd.f32 %v35, %v36
    %v40 = vadd.f32 %v39, %v37
    %v41 = vadd.f32 %v40, %v38
    %v42 = vrot.slane %v41, 4
    %v43 = vadd.f32 %v41, %v42
    %v44 = vrot.slane %v43, 2
    %v45 = vadd.f32 %v43, %v44
    %v46 = vrot.slane %v45, 1
    %v47 = vadd.f32 %v45, %v46
    %v48 = vrsqrt.pop %v47
    %v49 = vmul.f32 %v47, %v48
    %vm50 = vcmp.eq.f32.partialorder %v47, inf
    %v51 = vsel %vm50, %v47, %v49
    %vm52 = vcmp.eq.f32.partialorder %v47, 0.0
    %v53 = vand.u32 %v47, 2147483648
    %v54 = vsel %vm52, %v53, %v51
    %55 = vst [vmem:[#allocation2] sm:$0x1] %v54
    // Predicated region
    $region14: #{transe_forward.1} parent=1 // pred_check
      _
    $region15: #{transe_forward.1} parent=1 // pred_check_branch
      %57 = sbr.rel (0) target = $region17
    $region16: #{transe_forward.1} parent=1 // pred_region
      %s59 = ssub.s32 16, 16
      %60 = vsyncadd [#allocation3], %s59
      %s62 = sshll.u32 [#allocation2], 4
      %s63 = int_to_ptr.vmem [resolvable:$true] %s62
      %65 = dma.vmem_to_hbm [thread:$0]  %s63, 16, %s3, [#allocation3]
    $region17: #{transe_forward.1} parent=1 // pred_fallthru
      _
    // Predicated region
    $region18: #{transe_forward.1} parent=1 // pred_check
      _
    $region19: #{transe_forward.1} parent=1 // pred_check_branch
      %67 = sbr.rel (0) target = $region21
    $region20: #{transe_forward.1} parent=1 // pred_region
      %68 = dma.done [#allocation3], 16
    $region21: #{transe_forward.1} parent=1 // pred_fallthru
      _
    %69 = vsyncpa [#allocation3], 1

</llo_original>
